<compile_context>
chip_gen: v5e
topology: v5e:2x2
jax: 0.10.0
libtpu: 0.0.40
codegen_flags: <defaults>
</compile_context>

<pallas_src>
import functools
import math

import jax
import jax.numpy as jnp
from jax import lax
from jax.experimental import pallas as pl
from jax.experimental.pallas import tpu as pltpu


# --------------------------------------------------------------------------
# Small helpers
# --------------------------------------------------------------------------

def _round_up(x, m):
    return ((x + m - 1) // m) * m


def _pick_row_tile(n, max_tile=128):
    """Largest tile <= max_tile that divides n and is legal as a block dim."""
    if n <= max_tile:
        return n
    for t in range(max_tile, 0, -1):
        if n % t == 0 and (t % 8 == 0):
            return t
    return n  # fall back to a single full-extent block (always legal)


# --------------------------------------------------------------------------
# Pallas kernels
# --------------------------------------------------------------------------

def _conv_matmul_kernel(p_ref, w_ref, b_ref, o_ref):
    """One M-tile of the im2col conv: matmul + bias + ReLU (lane-dense Cout)."""
    acc = jnp.dot(p_ref[...], w_ref[...], preferred_element_type=jnp.float32)
    acc = acc + b_ref[...]
    o_ref[...] = jnp.maximum(acc, 0.0).astype(o_ref.dtype)


def _sine_pe_kernel(a_ref, b_ref, o_ref, *, tile_h, y_norm):
    """DETR sine PE as a single fused sin.

    Output block is (TILE_H, W*2*npf).  Lane l = wo*2*npf + ch encodes the
    spatial column wo and the channel ch.  Per-lane vectors (precomputed):
      y-lanes (ch <  npf): a = 1/dim_t[ch],  b = phase(ch)
      x-lanes (ch >= npf): a = 0,            b = x_coord(wo)/dim_t + phase
    value = sin(y_coord(row) * a + b); cos is sin with +pi/2 phase.
    """
    row = lax.broadcasted_iota(jnp.int32, o_ref.shape, 0).astype(jnp.float32)
    h0 = (pl.program_id(0) * tile_h).astype(jnp.float32)
    y_coord = (row + h0 + 1.0) * y_norm                      # (TH, L)
    o_ref[...] = jnp.sin(y_coord * a_ref[...] + b_ref[...]).astype(o_ref.dtype)


# --------------------------------------------------------------------------
# Conv wrapper (NHWC in / NHWC out), tiled + lane-dense Pallas matmul
# --------------------------------------------------------------------------

def conv3x3_s2_relu_nhwc(x, w_torch, bias):
    """3x3 conv, stride 2, pad 1, + ReLU.

    x: (B, H, W, C) NHWC.  w_torch: (Cout, Cin, 3, 3) PyTorch layout.
    Returns (B, Ho, Wo, Cout) NHWC.
    """
    B, H, W, C = x.shape
    Cout = w_torch.shape[0]
    k, stride, pad = 3, 2, 1
    Ho = (H + 2 * pad - k) // stride + 1
    Wo = (W + 2 * pad - k) // stride + 1

    # Wrapper-side im2col (see TODO(synk) above about moving this in-kernel).
    xp = jnp.pad(x, ((0, 0), (pad, pad), (pad, pad), (0, 0)))
    cols = []
    for i in range(k):
        for j in range(k):
            cols.append(xp[:, i:i + stride * Ho:stride, j:j + stride * Wo:stride, :])
    patches = jnp.concatenate(cols, axis=-1)                  # (B, Ho, Wo, 9*C)
    K = k * k * C
    M = B * Ho * Wo
    patches = patches.reshape(M, K)

    # Pad M so the grid tiles evenly; pad Cout to 128 lanes for dense stores.
    TILE_M = 512 if M >= 512 else _round_up(M, 8)
    M_pad = _round_up(M, TILE_M)
    if M_pad != M:
        patches = jnp.pad(patches, ((0, M_pad - M), (0, 0)))
    Cout_pad = _round_up(Cout, 128)

    # (Cout, Cin, kH, kW) -> (kH, kW, Cin, Cout) -> (K, Cout_pad)
    wmat = jnp.transpose(w_torch, (2, 3, 1, 0)).reshape(K, Cout)
    wmat = jnp.pad(wmat, ((0, 0), (0, Cout_pad - Cout)))
    bvec = jnp.pad(bias.reshape(1, Cout), ((0, 0), (0, Cout_pad - Cout)))

    grid = (M_pad // TILE_M,)
    out = pl.pallas_call(
        _conv_matmul_kernel,
        out_shape=jax.ShapeDtypeStruct((M_pad, Cout_pad), x.dtype),
        grid=grid,
        in_specs=[
            pl.BlockSpec((TILE_M, K), lambda m: (m, 0)),
            pl.BlockSpec((K, Cout_pad), lambda m: (0, 0)),
            pl.BlockSpec((1, Cout_pad), lambda m: (0, 0)),
        ],
        out_specs=pl.BlockSpec((TILE_M, Cout_pad), lambda m: (m, 0)),
        compiler_params=pltpu.CompilerParams(
            dimension_semantics=("parallel",),
            vmem_limit_bytes=32 * 1024 * 1024,
        ),
        cost_estimate=pl.CostEstimate(
            flops=2 * M_pad * K * Cout_pad,
            transcendentals=0,
            bytes_accessed=4 * (M_pad * K + K * Cout_pad + Cout_pad
                                + M_pad * Cout_pad),
        ),
    )(patches, wmat, bvec)

    return out[:M, :Cout].reshape(B, Ho, Wo, Cout)


# --------------------------------------------------------------------------
# Sine position embedding wrapper
# --------------------------------------------------------------------------

def sine_position_embedding(shape_bchw, num_pos_feats=16, temperature=10000.0,
                            scale=2.0 * math.pi, eps=1e-6, dtype=jnp.float32):
    """Returns (B, 2*num_pos_feats, H, W) sine position embedding."""
    B, _, H, W = shape_bchw
    npf = num_pos_feats
    L = W * 2 * npf

    # Per-lane multiplier/offset vectors (tiny, computed once in glue).
    ar = jnp.arange(npf, dtype=jnp.float32)
    inv_dim_t = temperature ** (-(2.0 * jnp.floor(ar / 2.0) / npf))    # (npf,)
    phase = (jnp.arange(npf) % 2).astype(jnp.float32) * (math.pi / 2)  # (npf,)
    x_coord = (jnp.arange(1, W + 1, dtype=jnp.float32) / (W + eps)) * scale  # (W,)
    y_norm = float(scale / (H + eps))

    a_y = jnp.broadcast_to(inv_dim_t[None, :], (W, npf))
    b_y = jnp.broadcast_to(phase[None, :], (W, npf))
    a_x = jnp.zeros((W, npf), jnp.float32)
    b_x = x_coord[:, None] * inv_dim_t[None, :] + phase[None, :]
    a_vec = jnp.concatenate([a_y, a_x], axis=-1).reshape(1, L)
    b_vec = jnp.concatenate([b_y, b_x], axis=-1).reshape(1, L)

    TH = _pick_row_tile(H)
    grid = (H // TH,)
    kernel = functools.partial(_sine_pe_kernel, tile_h=TH, y_norm=y_norm)

    pe = pl.pallas_call(
        kernel,
        out_shape=jax.ShapeDtypeStruct((H, L), jnp.float32),
        grid=grid,
        in_specs=[
            pl.BlockSpec((1, L), lambda r: (0, 0)),
            pl.BlockSpec((1, L), lambda r: (0, 0)),
        ],
        out_specs=pl.BlockSpec((TH, L), lambda r: (r, 0)),
        compiler_params=pltpu.CompilerParams(
            dimension_semantics=("parallel",),
            vmem_limit_bytes=32 * 1024 * 1024,
        ),
        cost_estimate=pl.CostEstimate(
            flops=3 * H * L,
            transcendentals=H * L,
            bytes_accessed=4 * (H * L + 2 * L),
        ),
    )(a_vec, b_vec)

    pe = pe.reshape(H, W, 2 * npf)
    pe = jnp.transpose(pe, (2, 0, 1))                        # (2*npf, H, W)
    return jnp.broadcast_to(pe[None], (B, 2 * npf, H, W)).astype(dtype)


# --------------------------------------------------------------------------
# FeatureExtractor: backbone (2 conv levels) + position embedding per level
# --------------------------------------------------------------------------

class FeatureExtractor:
    """Backbone with Position Embedding (JAX/Pallas port).

    Input:  (B, C, H, W) image tensor (stand-in for NestedTensor.tensors)
    Output: ([multi-layer (B, C_l, H_l, W_l) features],
             [multi-layer (B, 2*num_pos_feats, H_l, W_l) position embeddings])
    """

    def __init__(self, params, num_pos_feats=16):
        self.params = params
        self.num_pos_feats = num_pos_feats
        self.strides = [2, 4]
        self.num_channels = [params["conv1_w"].shape[0], params["conv2_w"].shape[0]]

    def backbone(self, x_nhwc):
        # Stays NHWC between levels (no NCHW<->NHWC round trip).
        f1 = conv3x3_s2_relu_nhwc(x_nhwc, self.params["conv1_w"], self.params["conv1_b"])
        f2 = conv3x3_s2_relu_nhwc(f1, self.params["conv2_w"], self.params["conv2_b"])
        return {"0": f1, "1": f2}

    def position_embedding(self, feature_nchw):
        return sine_position_embedding(feature_nchw.shape, self.num_pos_feats,
                                       dtype=feature_nchw.dtype)

    def __call__(self, tensor_list):
        x_nhwc = jnp.transpose(tensor_list, (0, 2, 3, 1))
        b_out = self.backbone(x_nhwc)
        features = []
        pos = []
        for _, output in sorted(b_out.items()):
            features.append(jnp.transpose(output, (0, 3, 1, 2)))   # NCHW API layout
        for feature in features:
            pos.append(self.position_embedding(feature))
        return (features, pos)

    def n_inter_layers(self):
        return len(self.strides)

    def n_inter_channels(self):
        return self.num_channels


# --------------------------------------------------------------------------
# Pure-JAX references (for numerical sanity checking only)
# --------------------------------------------------------------------------

def _conv_ref_nhwc(x_nhwc, w_torch, b):
    out = lax.conv_general_dilated(
        x_nhwc, jnp.transpose(w_torch, (2, 3, 1, 0)),
        window_strides=(2, 2), padding=((1, 1), (1, 1)),
        dimension_numbers=("NHWC", "HWIO", "NHWC"),
        precision=lax.Precision.HIGHEST)
    return jnp.maximum(out + b.reshape(1, 1, 1, -1), 0.0)


def _pe_ref(B, H, W, npf, temperature=10000.0, scale=2.0 * math.pi, eps=1e-6):
    y = jnp.arange(1, H + 1, dtype=jnp.float32)
    x = jnp.arange(1, W + 1, dtype=jnp.float32)
    y = y / (y[-1] + eps) * scale
    x = x / (x[-1] + eps) * scale
    ar = jnp.arange(npf, dtype=jnp.float32)
    dim_t = temperature ** (2.0 * jnp.floor(ar / 2.0) / npf)
    yy = jnp.broadcast_to(y[:, None], (H, W))
    xx = jnp.broadcast_to(x[None, :], (H, W))
    ty = yy[..., None] / dim_t
    tx = xx[..., None] / dim_t
    py = jnp.stack([jnp.sin(ty[..., 0::2]), jnp.cos(ty[..., 1::2])], axis=-1).reshape(H, W, npf)
    px = jnp.stack([jnp.sin(tx[..., 0::2]), jnp.cos(tx[..., 1::2])], axis=-1).reshape(H, W, npf)
    pe = jnp.concatenate([py, px], axis=-1).transpose(2, 0, 1)
    return jnp.broadcast_to(pe[None], (B, 2 * npf, H, W))


# --------------------------------------------------------------------------

if __name__ == "__main__":
    key = jax.random.PRNGKey(0)
    k_x, k_w1, k_b1, k_w2, k_b2 = jax.random.split(key, 5)

    B, C, H, W = 2, 4, 16, 16
    C1, C2 = 8, 16

    x = jax.random.normal(k_x, (B, C, H, W), dtype=jnp.float32)
    params = {
        "conv1_w": 0.1 * jax.random.normal(k_w1, (C1, C, 3, 3), dtype=jnp.float32),
        "conv1_b": 0.1 * jax.random.normal(k_b1, (C1,), dtype=jnp.float32),
        "conv2_w": 0.1 * jax.random.normal(k_w2, (C2, C1, 3, 3), dtype=jnp.float32),
        "conv2_b": 0.1 * jax.random.normal(k_b2, (C2,), dtype=jnp.float32),
    }

    model = FeatureExtractor(params, num_pos_feats=16)
    features, pos = model(x)

    features = [jax.block_until_ready(f) for f in features]
    pos = [jax.block_until_ready(p) for p in pos]

    # Shape checks (NCHW features, (B, 2*num_pos_feats, H, W) pos)
    assert features[0].shape == (B, C1, H // 2, W // 2)
    assert features[1].shape == (B, C2, H // 4, W // 4)
    assert pos[0].shape == (B, 32, H // 2, W // 2)
    assert pos[1].shape == (B, 32, H // 4, W // 4)
    assert all(bool(jnp.all(jnp.isfinite(f))) for f in features)
    assert all(bool(jnp.all(jnp.isfinite(p))) for p in pos)

    # Numerical checks against pure-JAX references
    xh = jnp.transpose(x, (0, 2, 3, 1))
    r1 = _conv_ref_nhwc(xh, params["conv1_w"], params["conv1_b"])
    r2 = _conv_ref_nhwc(r1, params["conv2_w"], params["conv2_b"])
    assert jnp.allclose(features[0], jnp.transpose(r1, (0, 3, 1, 2)), atol=1e-2, rtol=1e-2)
    assert jnp.allclose(features[1], jnp.transpose(r2, (0, 3, 1, 2)), atol=1e-2, rtol=1e-2)
    assert jnp.allclose(pos[0], _pe_ref(B, H // 2, W // 2, 16), atol=1e-4, rtol=1e-4)
    assert jnp.allclose(pos[1], _pe_ref(B, H // 4, W // 4, 16), atol=1e-4, rtol=1e-4)

    print("KERNEL_OK")
</pallas_src>

<mosaic_0001>
module attributes {stable_mosaic.version = 11 : i64} {
  func.func @_conv_matmul_kernel(%arg0: i32, %arg1: memref<128x36xf32, #tpu.memory_space<vmem>>, %arg2: memref<36x128xf32, #tpu.memory_space<vmem>>, %arg3: memref<1x128xf32, #tpu.memory_space<vmem>>, %arg4: memref<128x128xf32, #tpu.memory_space<vmem>>) attributes {dimension_semantics = [#tpu.dimension_semantics<parallel>], iteration_bounds = array<i64: 1>, scalar_prefetch = 0 : i64, scratch_operands = 0 : i64, tpu.core_type = #tpu.core_type<tc>, window_params = [{transform_indices = @transform_0, window_bounds = array<i64: 128, 36>}, {pipeline_mode = #tpu.pipeline_mode<synchronous>, transform_indices = @transform_1, window_bounds = array<i64: 36, 128>}, {pipeline_mode = #tpu.pipeline_mode<synchronous>, transform_indices = @transform_2, window_bounds = array<i64: 1, 128>}, {transform_indices = @transform_3, window_bounds = array<i64: 128, 128>}]} {
    %c0 = arith.constant 0 : index
    %c0_0 = arith.constant 0 : index
    %0 = vector.load %arg1[%c0, %c0_0] : memref<128x36xf32, #tpu.memory_space<vmem>>, vector<128x36xf32>
    %c0_1 = arith.constant 0 : index
    %c0_2 = arith.constant 0 : index
    %1 = vector.load %arg2[%c0_1, %c0_2] : memref<36x128xf32, #tpu.memory_space<vmem>>, vector<36x128xf32>
    %cst = arith.constant dense<0.000000e+00> : vector<128x128xf32>
    %2 = tpu.matmul %0, %1, %cst {dimension_numbers = #tpu.dot_dimension_numbers<[1], [0], [0], [1], [0, 0, 1, 1], [], []>} : vector<128x36xf32>, vector<36x128xf32>, vector<128x128xf32> -> vector<128x128xf32>
    %c0_3 = arith.constant 0 : index
    %c0_4 = arith.constant 0 : index
    %3 = vector.load %arg3[%c0_3, %c0_4] : memref<1x128xf32, #tpu.memory_space<vmem>>, vector<1x128xf32>
    %4 = vector.broadcast %3 : vector<1x128xf32> to vector<128x128xf32>
    %5 = arith.addf %2, %4 : vector<128x128xf32>
    %cst_5 = arith.constant 0.000000e+00 : f32
    %6 = vector.broadcast %cst_5 : f32 to vector<128x128xf32>
    %7 = arith.maximumf %5, %6 : vector<128x128xf32>
    %c0_6 = arith.constant 0 : index
    %c0_7 = arith.constant 0 : index
    %8 = vector.load %arg4[%c0_6, %c0_7] : memref<128x128xf32, #tpu.memory_space<vmem>>, vector<128x128xf32>
    tpu.vector_store %arg4[%c0_6, %c0_7], %7 {strides = array<i32>} : memref<128x128xf32, #tpu.memory_space<vmem>>, vector<128x128xf32>,
    return
  }
  func.func @transform_0(%arg0: i32) -> (i32, i32) {
    %c0_i32 = arith.constant 0 : i32
    %c0_i32_0 = arith.constant 0 : i32
    return %arg0, %c0_i32 : i32, i32
  }
  func.func @transform_1(%arg0: i32) -> (i32, i32) {
    %c0_i32 = arith.constant 0 : i32
    %c0_i32_0 = arith.constant 0 : i32
    %c0_i32_1 = arith.constant 0 : i32
    return %c0_i32, %c0_i32_0 : i32, i32
  }
  func.func @transform_2(%arg0: i32) -> (i32, i32) {
    %c0_i32 = arith.constant 0 : i32
    %c0_i32_0 = arith.constant 0 : i32
    %c0_i32_1 = arith.constant 0 : i32
    return %c0_i32, %c0_i32_0 : i32, i32
  }
  func.func @transform_3(%arg0: i32) -> (i32, i32) {
    %c0_i32 = arith.constant 0 : i32
    %c0_i32_0 = arith.constant 0 : i32
    return %arg0, %c0_i32 : i32, i32
  }
}

</mosaic_0001>

<llo_original>
// kernel: tpu_custom_call.1
$region0: #{tpu_custom_call.1}
  #allocation0 [shape = 'u32[]', space=smem, size = 0x4, offset = 0x4, fixed_abs, tag = 'smem constant byte address 0x4 - core index']
  #allocation1 [shape = 'u32[72,128]{1,0:T(1,128)}', space=vmem, size = 0x9000, scoped, tag = 'internal scratch']
  %s0 = inlined_call_operand.vmem [shape: f32[128,36], index: 0, kind: input, shape index: {}]
  %s1 = inlined_call_operand.vmem [shape: f32[36,128], index: 1, kind: input, shape index: {}]
  %s2 = inlined_call_operand.vmem [shape: f32[1,128], index: 2, kind: input, shape index: {}]
  %s3 = inlined_call_operand.hbm [shape: f32[128,128], index: 3, kind: output, shape index: {}]
  %s4 = sld [smem:[#allocation0]]
  $region22: #{tpu_custom_call.1} parent=0
    _
  %s6 = ssub.s32 1, %s4
  %s7 = scalar_select 0, %s6, %s4
  $region1: #{tpu_custom_call.1} parent=0
    #allocation2 [shape = 'u8[65536]{0}', space=vmem, size = 0x10000, scoped, tag = 'output window, operand 0, single buffered']
    #allocation3 [shape = 's32[1]{0}', space=sflag, size = 0x4, scoped, tag = 'scoped memory for tpu_custom_call.1']
    %8 = vsyncpa [#allocation3], 0
    // Predicated region
    $region2: #{tpu_custom_call.1} parent=1 // pred_check
      _
    $region3: #{tpu_custom_call.1} parent=1 // pred_check_branch
      %10 = sbr.rel (0) target = $region5
    $region4: #{tpu_custom_call.1} parent=1 // pred_region
      _
    $region5: #{tpu_custom_call.1} parent=1 // pred_fallthru
      _
    // Predicated region
    $region6: #{tpu_custom_call.1} parent=1 // pred_check
      _
    $region7: #{tpu_custom_call.1} parent=1 // pred_check_branch
      %12 = sbr.rel (0) target = $region9
    $region8: #{tpu_custom_call.1} parent=1 // pred_region
      _
    $region9: #{tpu_custom_call.1} parent=1 // pred_fallthru
      _
    // Predicated region
    $region10: #{tpu_custom_call.1} parent=1 // pred_check
      _
    $region11: #{tpu_custom_call.1} parent=1 // pred_check_branch
      %14 = sbr.rel (0) target = $region13
    $region12: #{tpu_custom_call.1} parent=1 // pred_region
      _
    $region13: #{tpu_custom_call.1} parent=1 // pred_fallthru
      _
    %v15 = vld [vmem:[%s0] sm:$0xff]
    %v16 = vld [vmem:[%s0 + $0x8] sm:$0xff]
    %v17 = vld [vmem:[%s0 + $0x10] sm:$0xff]
    %v18 = vld [vmem:[%s0 + $0x18] sm:$0xff]
    %v19 = vld [vmem:[%s0 + $0x20] sm:$0xff]
    %v20 = vld [vmem:[%s0 + $0x28] sm:$0xff]
    %v21 = vld [vmem:[%s0 + $0x30] sm:$0xff]
    %v22 = vld [vmem:[%s0 + $0x38] sm:$0xff]
    %v23 = vld [vmem:[%s0 + $0x40] sm:$0xff]
    %v24 = vld [vmem:[%s0 + $0x48] sm:$0xff]
    %v25 = vld [vmem:[%s0 + $0x50] sm:$0xff]
    %v26 = vld [vmem:[%s0 + $0x58] sm:$0xff]
    %v27 = vld [vmem:[%s0 + $0x60] sm:$0xff]
    %v28 = vld [vmem:[%s0 + $0x68] sm:$0xff]
    %v29 = vld [vmem:[%s0 + $0x70] sm:$0xff]
    %v30 = vld [vmem:[%s0 + $0x78] sm:$0xff]
    %v31 = vld [vmem:[%s1] sm:$0xff]
    %v32 = vld [vmem:[%s1 + $0x8] sm:$0xff]
    %v33 = vld [vmem:[%s1 + $0x10] sm:$0xff]
    %v34 = vld [vmem:[%s1 + $0x18] sm:$0xff]
    %v35 = vld [vmem:[%s1 + $0x20] sm:$0xf]
    %v36 = vld [vmem:[%s2] sm:$0x1]
    %v38 = vperm.slane %v36, 0
    %vm40 = vcmask 293888
    %v42 = vsel %vm40, %v15, 0
    %v45 = vsel %vm40, %v16, 0
    %v48 = vsel %vm40, %v17, 0
    %v51 = vsel %vm40, %v18, 0
    %v54 = vsel %vm40, %v19, 0
    %v57 = vsel %vm40, %v20, 0
    %v60 = vsel %vm40, %v21, 0
    %v63 = vsel %vm40, %v22, 0
    %v66 = vsel %vm40, %v23, 0
    %v69 = vsel %vm40, %v24, 0
    %v72 = vsel %vm40, %v25, 0
    %v75 = vsel %vm40, %v26, 0
    %v78 = vsel %vm40, %v27, 0
    %v81 = vsel %vm40, %v28, 0
    %v84 = vsel %vm40, %v29, 0
    %v87 = vsel %vm40, %v30, 0
    %vm89 = vcmask 1043456
    %v91 = vsel %vm89, %v35, 0
    %93 = vmatpush.msra.mxu0 0.0
    %94 = vmatpush.msra.mxu0 0.0
    %95 = vmatpush.msra.mxu0 0.0
    %96 = vmatpush.msra.mxu0 0.0
    %97 = vmatpush.msra.mxu0 0.0
    %98 = vmatpush.msra.mxu0 0.0
    %99 = vmatpush.msra.mxu0 0.0
    %100 = vmatpush.msra.mxu0 0.0
    %101 = vmatpush.msra.mxu0 0.0
    %102 = vmatpush.msra.mxu0 0.0
    %103 = vmatpush.msra.mxu0 0.0
    %104 = vmatpush.msra.mxu0 %v91
    %105 = vmatpush.msra.mxu0 %v34
    %106 = vmatpush.msra.mxu0 %v33
    %107 = vmatpush.msra.mxu0 %v32
    %108 = vmatpush.msra.mxu0 %v31
    %109 = vmatmul.f32.gmra.mxu0 %v42
    %v110 = vpop.f32.mrf.mxu0
    %v111 = vadd.f32 %v38, %v110
    %112 = vmatmul.f32.gmra.mxu0 %v45
    %v113 = vpop.f32.mrf.mxu0
    %v114 = vadd.f32 %v38, %v113
    %115 = vmatmul.f32.gmra.mxu0 %v48
    %v116 = vpop.f32.mrf.mxu0
    %v117 = vadd.f32 %v38, %v116
    %118 = vmatmul.f32.gmra.mxu0 %v51
    %v119 = vpop.f32.mrf.mxu0
    %v120 = vadd.f32 %v38, %v119
    %121 = vmatmul.f32.gmra.mxu0 %v54
    %v122 = vpop.f32.mrf.mxu0
    %v123 = vadd.f32 %v38, %v122
    %124 = vmatmul.f32.gmra.mxu0 %v57
    %v125 = vpop.f32.mrf.mxu0
    %v126 = vadd.f32 %v38, %v125
    %127 = vmatmul.f32.gmra.mxu0 %v60
    %v128 = vpop.f32.mrf.mxu0
    %v129 = vadd.f32 %v38, %v128
    %130 = vmatmul.f32.gmra.mxu0 %v63
    %v131 = vpop.f32.mrf.mxu0
    %v132 = vadd.f32 %v38, %v131
    %133 = vmatmul.f32.gmra.mxu0 %v66
    %v134 = vpop.f32.mrf.mxu0
    %v135 = vadd.f32 %v38, %v134
    %136 = vmatmul.f32.gmra.mxu0 %v69
    %v137 = vpop.f32.mrf.mxu0
    %v138 = vadd.f32 %v38, %v137
    %139 = vmatmul.f32.gmra.mxu0 %v72
    %v140 = vpop.f32.mrf.mxu0
    %v141 = vadd.f32 %v38, %v140
    %142 = vmatmul.f32.gmra.mxu0 %v75
    %v143 = vpop.f32.mrf.mxu0
    %v144 = vadd.f32 %v38, %v143
    %145 = vmatmul.f32.gmra.mxu0 %v78
    %v146 = vpop.f32.mrf.mxu0
    %v147 = vadd.f32 %v38, %v146
    %148 = vmatmul.f32.gmra.mxu0 %v81
    %v149 = vpop.f32.mrf.mxu0
    %v150 = vadd.f32 %v38, %v149
    %151 = vmatmul.f32.gmra.mxu0 %v84
    %v152 = vpop.f32.mrf.mxu0
    %v153 = vadd.f32 %v38, %v152
    %154 = vmatmul.f32.gmra.mxu0 %v87
    %v155 = vpop.f32.mrf.mxu0
    %v156 = vadd.f32 %v38, %v155
    %157 = vdwg.mxu0
    %v158 = vmax.f32 %v111, 0.0
    %v159 = vmax.f32 %v114, 0.0
    %v160 = vmax.f32 %v117, 0.0
    %v161 = vmax.f32 %v120, 0.0
    %v162 = vmax.f32 %v123, 0.0
    %v163 = vmax.f32 %v126, 0.0
    %v164 = vmax.f32 %v129, 0.0
    %v165 = vmax.f32 %v132, 0.0
    %v166 = vmax.f32 %v135, 0.0
    %v167 = vmax.f32 %v138, 0.0
    %v168 = vmax.f32 %v141, 0.0
    %v169 = vmax.f32 %v144, 0.0
    %v170 = vmax.f32 %v147, 0.0
    %v171 = vmax.f32 %v150, 0.0
    %v172 = vmax.f32 %v153, 0.0
    %v173 = vmax.f32 %v156, 0.0
    %174 = vst [vmem:[#allocation2] sm:$0xff] %v158
    %175 = vst [vmem:[#allocation2 + $0x8] sm:$0xff] %v159
    %176 = vst [vmem:[#allocation2 + $0x10] sm:$0xff] %v160
    %177 = vst [vmem:[#allocation2 + $0x18] sm:$0xff] %v161
    %178 = vst [vmem:[#allocation2 + $0x20] sm:$0xff] %v162
    %179 = vst [vmem:[#allocation2 + $0x28] sm:$0xff] %v163
    %180 = vst [vmem:[#allocation2 + $0x30] sm:$0xff] %v164
    %181 = vst [vmem:[#allocation2 + $0x38] sm:$0xff] %v165
    %182 = vst [vmem:[#allocation2 + $0x40] sm:$0xff] %v166
    %183 = vst [vmem:[#allocation2 + $0x48] sm:$0xff] %v167
    %184 = vst [vmem:[#allocation2 + $0x50] sm:$0xff] %v168
    %185 = vst [vmem:[#allocation2 + $0x58] sm:$0xff] %v169
    %186 = vst [vmem:[#allocation2 + $0x60] sm:$0xff] %v170
    %187 = vst [vmem:[#allocation2 + $0x68] sm:$0xff] %v171
    %188 = vst [vmem:[#allocation2 + $0x70] sm:$0xff] %v172
    %189 = vst [vmem:[#allocation2 + $0x78] sm:$0xff] %v173
    // Predicated region
    $region14: #{tpu_custom_call.1} parent=1 // pred_check
      _
    $region15: #{tpu_custom_call.1} parent=1 // pred_check_branch
      %191 = sbr.rel (0) target = $region17
    $region16: #{tpu_custom_call.1} parent=1 // pred_region
      %193 = vsyncadd [#allocation3], 0
      %s194 = sshll.u32 [#allocation2], 4
      %s195 = int_to_ptr.vmem [resolvable:$true] %s194
      %s196 = sshll.u32 %s3, 4
      %s197 = int_to_ptr.hbm [resolvable:$true] %s196
      %202 = dma.vmem_to_hbm [thread:$0]  %s195, 2048, %s197, [#allocation3], 128, 128, 8
    $region17: #{tpu_custom_call.1} parent=1 // pred_fallthru
      _
    // Predicated region
    $region18: #{tpu_custom_call.1} parent=1 // pred_check
      _
    $region19: #{tpu_custom_call.1} parent=1 // pred_check_branch
      %204 = sbr.rel (0) target = $region21
    $region20: #{tpu_custom_call.1} parent=1 // pred_region
      %206 = dma.done [#allocation3], 2048
    $region21: #{tpu_custom_call.1} parent=1 // pred_fallthru
      _
    %207 = vsyncpa [#allocation3], 1

</llo_original>
